<compile_context>
chip_gen: v6e
topology: v6e:2x2x1
jax: 0.10.0
libtpu: 0.0.40
codegen_flags: <defaults>
</compile_context>

<pallas_src>
import functools
import math

import jax
import jax.numpy as jnp
from jax import lax
from jax.experimental import pallas as pl
from jax.experimental.pallas import tpu as pltpu

_HAS_BUFFERED = hasattr(pl, "Buffered")


def _layernorm(x, w, b, eps=1e-5):
    # x: (..., D); w/b broadcastable to (..., D). Matches nn.LayerNorm (eps=1e-5).
    mu = jnp.mean(x, axis=-1, keepdims=True)
    xc = x - mu
    var = jnp.mean(xc * xc, axis=-1, keepdims=True)
    return xc * lax.rsqrt(var + eps) * w + b


def _const_spec(shape):
    """BlockSpec for a grid-invariant constant (weights / norm params)."""
    index_map = lambda *idx: (0,) * len(shape)
    if _HAS_BUFFERED:
        # Grid-invariant: single buffer is enough (halves weight VMEM; matters on
        # v7x's 64 MiB ceiling at large D).
        return pl.BlockSpec(shape, index_map, pipeline_mode=pl.Buffered(1))
    return pl.BlockSpec(shape, index_map)


def _pick_tile(n, preferred):
    """Largest sublane-aligned (multiple of 8) divisor of n that is <= preferred.

    Falls back to the full dimension (always a legal block) only if no aligned
    divisor exists, so a ragged length can no longer silently blow up the
    per-step VMEM footprint.
    """
    t = min(preferred, n)
    while t >= 8:
        if n % t == 0 and t % 8 == 0:
            return t
        t -= 1
    return n


# --------------------------------------------------------------------------- #
# Pass 1: residual add + LayerNorm(residual) + fused K|V projection.
# Runs once per (batch, k-tile); this work is never repeated per q-tile.
# --------------------------------------------------------------------------- #
def kv_residual_kernel(hs_ref, *rest, has_residual, compute_dtype):
    if has_residual:
        res_ref = rest[0]
        rest = rest[1:]
    nw_ref, nb_ref, wkv_ref, res_out_ref, k_out_ref, v_out_ref = rest

    hs = hs_ref[0].astype(jnp.float32)
    if has_residual:
        residual = hs + res_ref[0].astype(jnp.float32)
    else:
        residual = hs
    res_out_ref[0] = residual.astype(res_out_ref.dtype)

    hn = _layernorm(residual, nw_ref[0], nb_ref[0]).astype(compute_dtype)

    # Fused K|V projection: one (TK, 2D) MXU issue, f32 accumulation, then a
    # single cast back to bf16 before slicing (keeps live f32 vregs small).
    d = k_out_ref.shape[-1]
    kv = jnp.dot(hn, wkv_ref[...],
                 preferred_element_type=jnp.float32).astype(compute_dtype)
    k_out_ref[0] = kv[:, :d]
    v_out_ref[0] = kv[:, d:]


# --------------------------------------------------------------------------- #
# Pass 2: flash-style cross-attention over precomputed bf16 K/V.
# --------------------------------------------------------------------------- #
def flash_cross_attn_kernel(q_ref, k_ref, v_ref, nqw_ref, nqb_ref, wq_ref, wo_ref,
                            hs_out_ref, qp_ref, m_ref, l_ref, acc_ref,
                            *, compute_dtype, scale):
    k_idx = pl.program_id(2)

    # Per (b, q-tile) init: online-softmax state + scaled Q projection (once).
    @pl.when(k_idx == 0)
    def _init():
        m_ref[...] = jnp.full(m_ref.shape, -jnp.inf, m_ref.dtype)
        l_ref[...] = jnp.zeros(l_ref.shape, l_ref.dtype)
        acc_ref[...] = jnp.zeros(acc_ref.shape, acc_ref.dtype)
        qn = _layernorm(q_ref[0].astype(jnp.float32), nqw_ref[0], nqb_ref[0])
        # fold 1/sqrt(D) into the (TQ, D) tensor (cheaper than scaling (TQ, TK)).
        qn = (qn * scale).astype(compute_dtype)
        qp_ref[...] = jnp.dot(
            qn, wq_ref[...], preferred_element_type=jnp.float32
        ).astype(compute_dtype)

    # scores: contract the last dims (trans-B semantics, no K transpose copy).
    s = lax.dot_general(
        qp_ref[...], k_ref[0],
        dimension_numbers=(((1,), (1,)), ((), ())),
        preferred_element_type=jnp.float32)                 # (TQ, TK) f32

    # Online softmax — all elementwise math in f32 (v5e has no bf16 VPU).
    m_prev = m_ref[...]
    m_new = jnp.maximum(m_prev, jnp.max(s, axis=-1, keepdims=True))
    alpha = jnp.exp(m_prev - m_new)
    p = jnp.exp(s - m_new)
    l_ref[...] = alpha * l_ref[...] + jnp.sum(p, axis=-1, keepdims=True)
    acc_ref[...] = alpha * acc_ref[...] + jnp.dot(
        p.astype(compute_dtype), v_ref[0], preferred_element_type=jnp.float32)
    m_ref[...] = m_new

    # Finalize: normalize (EUP reciprocal) + output projection.
    @pl.when(k_idx == pl.num_programs(2) - 1)
    def _finalize():
        inv_l = pl.reciprocal(l_ref[...], approx=True)
        attn = (acc_ref[...] * inv_l).astype(compute_dtype)
        out = jnp.dot(attn, wo_ref[...], preferred_element_type=jnp.float32)
        hs_out_ref[0] = out.astype(hs_out_ref.dtype)


def cross_block(query, hidden_states, residual, params, *,
                q_tile=128, k_tile=128, compute_dtype=jnp.bfloat16,
                vmem_limit_bytes=32 * 1024 * 1024):
    """CrossBlock forward. Returns (hidden_states_out, residual_out)."""
    B, Lq, D = query.shape
    Bk, Lk, Dk = hidden_states.shape
    assert (B, D) == (Bk, Dk)

    TQ = _pick_tile(Lq, q_tile)
    TK = _pick_tile(Lk, k_tile)
    NQ, NK = Lq // TQ, Lk // TK

    has_residual = residual is not None
    cd = compute_dtype
    scale = 1.0 / math.sqrt(D)

    # Norm params stay f32; projection weights bf16 (MXU operands); Wk|Wv fused.
    nw = params["norm_w"].astype(jnp.float32).reshape(1, D)
    nb = params["norm_b"].astype(jnp.float32).reshape(1, D)
    nqw = params["norm_q_w"].astype(jnp.float32).reshape(1, D)
    nqb = params["norm_q_b"].astype(jnp.float32).reshape(1, D)
    wq = params["wq"].astype(cd)
    wkv = jnp.concatenate([params["wk"], params["wv"]], axis=1).astype(cd)  # (D, 2D)
    wo = params["wo"].astype(cd)

    # ---------------- Pass 1: residual + K/V projection (grid (B, NK)) -------
    kv_kernel = functools.partial(
        kv_residual_kernel, has_residual=has_residual, compute_dtype=cd)
    kv_spec = pl.BlockSpec((1, TK, D), lambda b, k: (b, k, 0))
    in_specs1 = [kv_spec] + ([kv_spec] if has_residual else []) \
        + [_const_spec((1, D)), _const_spec((1, D)), _const_spec((D, 2 * D))]
    args1 = [hidden_states] + ([residual] if has_residual else []) + [nw, nb, wkv]

    res_out, k_proj, v_proj = pl.pallas_call(
        kv_kernel,
        out_shape=(
            jax.ShapeDtypeStruct((B, Lk, D), hidden_states.dtype),  # residual out
            jax.ShapeDtypeStruct((B, Lk, D), cd),                   # K (bf16 in HBM)
            jax.ShapeDtypeStruct((B, Lk, D), cd),                   # V (bf16 in HBM)
        ),
        grid_spec=pltpu.PrefetchScalarGridSpec(
            num_scalar_prefetch=0,
            grid=(B, NK),
            in_specs=in_specs1,
            out_specs=[kv_spec, kv_spec, kv_spec]),
        compiler_params=pltpu.CompilerParams(
            dimension_semantics=("parallel", "parallel"),
            vmem_limit_bytes=vmem_limit_bytes),
    )(*args1)

    # ---------------- Pass 2: flash cross-attention (grid (B, NQ, NK)) -------
    attn_kernel = functools.partial(
        flash_cross_attn_kernel, compute_dtype=cd, scale=scale)
    q_spec = pl.BlockSpec((1, TQ, D), lambda b, q, k: (b, q, 0))
    kvt_spec = pl.BlockSpec((1, TK, D), lambda b, q, k: (b, k, 0))

    hs_out = pl.pallas_call(
        attn_kernel,
        out_shape=jax.ShapeDtypeStruct((B, Lq, D), query.dtype),
        grid_spec=pltpu.PrefetchScalarGridSpec(
            num_scalar_prefetch=0,
            grid=(B, NQ, NK),                 # Lk reduction axis last
            in_specs=[q_spec, kvt_spec, kvt_spec,
                      _const_spec((1, D)), _const_spec((1, D)),
                      _const_spec((D, D)), _const_spec((D, D))],
            out_specs=pl.BlockSpec((1, TQ, D), lambda b, q, k: (b, q, 0)),
            scratch_shapes=[
                pltpu.VMEM((TQ, D), cd),            # Q projection (per q-tile)
                pltpu.VMEM((TQ, 1), jnp.float32),   # m (running max)
                pltpu.VMEM((TQ, 1), jnp.float32),   # l (running denom)
                pltpu.VMEM((TQ, D), jnp.float32),   # acc (unnormalized PV)
            ]),
        # Residual output is produced in pass 1, so both b and q are safe to
        # shard across TensorCores (v7x megacore); Lk is the reduction.
        compiler_params=pltpu.CompilerParams(
            dimension_semantics=("parallel", "parallel", "arbitrary"),
            vmem_limit_bytes=vmem_limit_bytes),
    )(query, k_proj, v_proj, nqw, nqb, wq, wo)

    return hs_out, res_out


def cross_block_reference(query, hidden_states, residual, params,
                          compute_dtype=jnp.bfloat16):
    """Pure-JAX reference with matching matmul precision (bf16 operands, f32 acc)."""
    residual = hidden_states + residual if residual is not None else hidden_states
    D = query.shape[-1]
    scale = 1.0 / math.sqrt(D)
    cd = compute_dtype

    hn = _layernorm(residual, params["norm_w"], params["norm_b"]).astype(cd)
    qn = (_layernorm(query, params["norm_q_w"], params["norm_q_b"]) * scale).astype(cd)
    wq = params["wq"].astype(cd)
    wk = params["wk"].astype(cd)
    wv = params["wv"].astype(cd)
    wo = params["wo"].astype(cd)

    Q = jnp.einsum("bqd,de->bqe", qn, wq, preferred_element_type=jnp.float32).astype(cd)
    K = jnp.einsum("bkd,de->bke", hn, wk, preferred_element_type=jnp.float32).astype(cd)
    V = jnp.einsum("bkd,de->bke", hn, wv, preferred_element_type=jnp.float32).astype(cd)
    s = jnp.einsum("bqd,bkd->bqk", Q, K, preferred_element_type=jnp.float32)
    p = jax.nn.softmax(s, axis=-1)
    attn = jnp.einsum("bqk,bkd->bqd", p.astype(cd), V,
                      preferred_element_type=jnp.float32).astype(cd)
    out = jnp.einsum("bqd,de->bqe", attn, wo, preferred_element_type=jnp.float32)
    return out.astype(query.dtype), residual


def init_params(key, dim):
    """LayerNorms follow nn.LayerNorm defaults (weight=1, bias=0); projections scaled-normal."""
    kq, kk, kv, ko = jax.random.split(key, 4)
    std = 1.0 / math.sqrt(dim)
    return {
        "norm_w": jnp.ones((dim,), jnp.float32),
        "norm_b": jnp.zeros((dim,), jnp.float32),
        "norm_q_w": jnp.ones((dim,), jnp.float32),
        "norm_q_b": jnp.zeros((dim,), jnp.float32),
        "wq": jax.random.normal(kq, (dim, dim), jnp.float32) * std,
        "wk": jax.random.normal(kk, (dim, dim), jnp.float32) * std,
        "wv": jax.random.normal(kv, (dim, dim), jnp.float32) * std,
        "wo": jax.random.normal(ko, (dim, dim), jnp.float32) * std,
    }


if __name__ == "__main__":
    # Lane-dense, (8,128)-aligned shapes; multiple k-tiles so the online-softmax
    # reduction is exercised, and Lk != Lq so the two passes can't be confused.
    B, Lq, Lk, D = 2, 128, 256, 128

    key = jax.random.PRNGKey(0)
    k_q, k_h, k_r, k_p = jax.random.split(key, 4)
    query = jax.random.normal(k_q, (B, Lq, D), jnp.float32)
    hidden_states = jax.random.normal(k_h, (B, Lk, D), jnp.float32)
    residual = jax.random.normal(k_r, (B, Lk, D), jnp.float32)
    params = init_params(k_p, D)

    # With residual (general block). Default tiles (128x128).
    hs_out, res_out = cross_block(query, hidden_states, residual, params)
    jax.block_until_ready((hs_out, res_out))
    hs_ref, res_ref = cross_block_reference(query, hidden_states, residual, params)
    assert hs_out.shape == (B, Lq, D) and res_out.shape == (B, Lk, D)
    assert jnp.allclose(res_out, res_ref, atol=1e-5, rtol=1e-5), "residual mismatch"
    assert jnp.allclose(hs_out, hs_ref, atol=2e-2, rtol=2e-2), "mixer output mismatch"

    # residual=None (first block): kernel variant skips the residual stream + add.
    hs0_out, res0_out = cross_block(query, hidden_states, None, params)
    jax.block_until_ready((hs0_out, res0_out))
    hs0_ref, res0_ref = cross_block_reference(query, hidden_states, None, params)
    assert jnp.allclose(res0_out, res0_ref, atol=1e-5, rtol=1e-5), "residual(None) mismatch"
    assert jnp.allclose(hs0_out, hs0_ref, atol=2e-2, rtol=2e-2), "mixer(None) mismatch"

    print("KERNEL_OK")
</pallas_src>

<mosaic_0001>
module attributes {stable_mosaic.version = 11 : i64} {
  func.func @kv_residual_kernel(%arg0: i32, %arg1: i32, %arg2: memref<1x128x128xf32, #tpu.memory_space<vmem>>, %arg3: memref<1x128x128xf32, #tpu.memory_space<vmem>>, %arg4: memref<1x128xf32, #tpu.memory_space<vmem>>, %arg5: memref<1x128xf32, #tpu.memory_space<vmem>>, %arg6: memref<128x256xbf16, #tpu.memory_space<vmem>>, %arg7: memref<1x128x128xf32, #tpu.memory_space<vmem>>, %arg8: memref<1x128x128xbf16, #tpu.memory_space<vmem>>, %arg9: memref<1x128x128xbf16, #tpu.memory_space<vmem>>) attributes {dimension_semantics = [#tpu.dimension_semantics<parallel>, #tpu.dimension_semantics<parallel>], iteration_bounds = array<i64: 2, 2>, scalar_prefetch = 0 : i64, scratch_operands = 0 : i64, tpu.core_type = #tpu.core_type<tc>, window_params = [{transform_indices = @transform_0, window_bounds = array<i64: 1, 128, 128>}, {transform_indices = @transform_1, window_bounds = array<i64: 1, 128, 128>}, {pipeline_mode = #tpu.pipeline_mode<synchronous>, transform_indices = @transform_2, window_bounds = array<i64: 1, 128>}, {pipeline_mode = #tpu.pipeline_mode<synchronous>, transform_indices = @transform_3, window_bounds = array<i64: 1, 128>}, {pipeline_mode = #tpu.pipeline_mode<synchronous>, transform_indices = @transform_4, window_bounds = array<i64: 128, 256>}, {transform_indices = @transform_5, window_bounds = array<i64: 1, 128, 128>}, {transform_indices = @transform_6, window_bounds = array<i64: 1, 128, 128>}, {transform_indices = @transform_7, window_bounds = array<i64: 1, 128, 128>}]} {
    %c0 = arith.constant 0 : index
    %c0_0 = arith.constant 0 : index
    %c0_1 = arith.constant 0 : index
    %0 = vector.load %arg2[%c0, %c0_0, %c0_1] : memref<1x128x128xf32, #tpu.memory_space<vmem>>, vector<1x128x128xf32>
    %1 = vector.shape_cast %0 : vector<1x128x128xf32> to vector<128x128xf32>
    %c0_2 = arith.constant 0 : index
    %c0_3 = arith.constant 0 : index
    %c0_4 = arith.constant 0 : index
    %2 = vector.load %arg3[%c0_2, %c0_3, %c0_4] : memref<1x128x128xf32, #tpu.memory_space<vmem>>, vector<1x128x128xf32>
    %3 = vector.shape_cast %2 : vector<1x128x128xf32> to vector<128x128xf32>
    %4 = arith.addf %1, %3 : vector<128x128xf32>
    %c0_5 = arith.constant 0 : index
    %c0_6 = arith.constant 0 : index
    %c0_7 = arith.constant 0 : index
    %5 = vector.load %arg7[%c0_5, %c0_6, %c0_7] : memref<1x128x128xf32, #tpu.memory_space<vmem>>, vector<1x128x128xf32>
    %6 = vector.shape_cast %5 : vector<1x128x128xf32> to vector<128x128xf32>
    %7 = vector.shape_cast %4 : vector<128x128xf32> to vector<1x128x128xf32>
    tpu.vector_store %arg7[%c0_5, %c0_6, %c0_7], %7 {strides = array<i32>} : memref<1x128x128xf32, #tpu.memory_space<vmem>>, vector<1x128x128xf32>,
    %c0_8 = arith.constant 0 : index
    %c0_9 = arith.constant 0 : index
    %8 = vector.load %arg4[%c0_8, %c0_9] : memref<1x128xf32, #tpu.memory_space<vmem>>, vector<1x128xf32>
    %9 = vector.shape_cast %8 : vector<1x128xf32> to vector<128xf32>
    %c0_10 = arith.constant 0 : index
    %c0_11 = arith.constant 0 : index
    %10 = vector.load %arg5[%c0_10, %c0_11] : memref<1x128xf32, #tpu.memory_space<vmem>>, vector<1x128xf32>
    %11 = vector.shape_cast %10 : vector<1x128xf32> to vector<128xf32>
    %cst = arith.constant dense<0.000000e+00> : vector<128xf32>
    %12 = vector.multi_reduction <add>, %4, %cst [1] : vector<128x128xf32> to vector<128xf32>
    %13 = vector.shape_cast %12 : vector<128xf32> to vector<128x1xf32>
    %cst_12 = arith.constant 1.280000e+02 : f32
    %14 = vector.broadcast %cst_12 : f32 to vector<128x1xf32>
    %15 = arith.divf %13, %14 : vector<128x1xf32>
    %16 = vector.broadcast %15 : vector<128x1xf32> to vector<128x128xf32>
    %17 = arith.subf %4, %16 : vector<128x128xf32>
    %18 = arith.mulf %17, %17 : vector<128x128xf32>
    %cst_13 = arith.constant dense<0.000000e+00> : vector<128xf32>
    %19 = vector.multi_reduction <add>, %18, %cst_13 [1] : vector<128x128xf32> to vector<128xf32>
    %20 = vector.shape_cast %19 : vector<128xf32> to vector<128x1xf32>
    %cst_14 = arith.constant 1.280000e+02 : f32
    %21 = vector.broadcast %cst_14 : f32 to vector<128x1xf32>
    %22 = arith.divf %20, %21 : vector<128x1xf32>
    %cst_15 = arith.constant 9.99999974E-6 : f32
    %23 = vector.broadcast %cst_15 : f32 to vector<128x1xf32>
    %24 = arith.addf %22, %23 : vector<128x1xf32>
    %25 = math.rsqrt %24 : vector<128x1xf32>
    %26 = vector.broadcast %25 : vector<128x1xf32> to vector<128x128xf32>
    %27 = arith.mulf %17, %26 : vector<128x128xf32>
    %28 = vector.shape_cast %9 : vector<128xf32> to vector<1x128xf32>
    %29 = vector.broadcast %28 : vector<1x128xf32> to vector<128x128xf32>
    %30 = arith.mulf %27, %29 : vector<128x128xf32>
    %31 = vector.shape_cast %11 : vector<128xf32> to vector<1x128xf32>
    %32 = vector.broadcast %31 : vector<1x128xf32> to vector<128x128xf32>
    %33 = arith.addf %30, %32 : vector<128x128xf32>
    %34 = arith.truncf %33 : vector<128x128xf32> to vector<128x128xbf16>
    %c0_16 = arith.constant 0 : index
    %c0_17 = arith.constant 0 : index
    %35 = vector.load %arg6[%c0_16, %c0_17] : memref<128x256xbf16, #tpu.memory_space<vmem>>, vector<128x256xbf16>
    %cst_18 = arith.constant dense<0.000000e+00> : vector<128x256xf32>
    %36 = tpu.matmul %34, %35, %cst_18 {dimension_numbers = #tpu.dot_dimension_numbers<[1], [0], [0], [1], [0, 0, 1, 1], [], []>} : vector<128x128xbf16>, vector<128x256xbf16>, vector<128x256xf32> -> vector<128x256xf32>
    %37 = arith.truncf %36 : vector<128x256xf32> to vector<128x256xbf16>
    %38 = vector.extract_strided_slice %37 {offsets = [0, 0], sizes = [128, 128], strides = [1, 1]} : vector<128x256xbf16> to vector<128x128xbf16>
    %c0_19 = arith.constant 0 : index
    %c0_20 = arith.constant 0 : index
    %c0_21 = arith.constant 0 : index
    %39 = vector.load %arg8[%c0_19, %c0_20, %c0_21] : memref<1x128x128xbf16, #tpu.memory_space<vmem>>, vector<1x128x128xbf16>
    %40 = vector.shape_cast %39 : vector<1x128x128xbf16> to vector<128x128xbf16>
    %41 = vector.shape_cast %38 : vector<128x128xbf16> to vector<1x128x128xbf16>
    tpu.vector_store %arg8[%c0_19, %c0_20, %c0_21], %41 {strides = array<i32>} : memref<1x128x128xbf16, #tpu.memory_space<vmem>>, vector<1x128x128xbf16>,
    %42 = vector.extract_strided_slice %37 {offsets = [0, 128], sizes = [128, 128], strides = [1, 1]} : vector<128x256xbf16> to vector<128x128xbf16>
    %c0_22 = arith.constant 0 : index
    %c0_23 = arith.constant 0 : index
    %c0_24 = arith.constant 0 : index
    %43 = vector.load %arg9[%c0_22, %c0_23, %c0_24] : memref<1x128x128xbf16, #tpu.memory_space<vmem>>, vector<1x128x128xbf16>
    %44 = vector.shape_cast %43 : vector<1x128x128xbf16> to vector<128x128xbf16>
    %45 = vector.shape_cast %42 : vector<128x128xbf16> to vector<1x128x128xbf16>
    tpu.vector_store %arg9[%c0_22, %c0_23, %c0_24], %45 {strides = array<i32>} : memref<1x128x128xbf16, #tpu.memory_space<vmem>>, vector<1x128x128xbf16>,
    return
  }
  func.func @transform_0(%arg0: i32, %arg1: i32) -> (i32, i32, i32) {
    %c0_i32 = arith.constant 0 : i32
    %c0_i32_0 = arith.constant 0 : i32
    return %arg0, %arg1, %c0_i32 : i32, i32, i32
  }
  func.func @transform_1(%arg0: i32, %arg1: i32) -> (i32, i32, i32) {
    %c0_i32 = arith.constant 0 : i32
    %c0_i32_0 = arith.constant 0 : i32
    return %arg0, %arg1, %c0_i32 : i32, i32, i32
  }
  func.func @transform_2(%arg0: i32, %arg1: i32) -> (i32, i32) {
    %c0_i32 = arith.constant 0 : i32
    %c0_i32_0 = arith.constant 0 : i32
    %c0_i32_1 = arith.constant 0 : i32
    return %c0_i32, %c0_i32_0 : i32, i32
  }
  func.func @transform_3(%arg0: i32, %arg1: i32) -> (i32, i32) {
    %c0_i32 = arith.constant 0 : i32
    %c0_i32_0 = arith.constant 0 : i32
    %c0_i32_1 = arith.constant 0 : i32
    return %c0_i32, %c0_i32_0 : i32, i32
  }
  func.func @transform_4(%arg0: i32, %arg1: i32) -> (i32, i32) {
    %c0_i32 = arith.constant 0 : i32
    %c0_i32_0 = arith.constant 0 : i32
    %c0_i32_1 = arith.constant 0 : i32
    return %c0_i32, %c0_i32_0 : i32, i32
  }
  func.func @transform_5(%arg0: i32, %arg1: i32) -> (i32, i32, i32) {
    %c0_i32 = arith.constant 0 : i32
    %c0_i32_0 = arith.constant 0 : i32
    return %arg0, %arg1, %c0_i32 : i32, i32, i32
  }
  func.func @transform_6(%arg0: i32, %arg1: i32) -> (i32, i32, i32) {
    %c0_i32 = arith.constant 0 : i32
    %c0_i32_0 = arith.constant 0 : i32
    return %arg0, %arg1, %c0_i32 : i32, i32, i32
  }
  func.func @transform_7(%arg0: i32, %arg1: i32) -> (i32, i32, i32) {
    %c0_i32 = arith.constant 0 : i32
    %c0_i32_0 = arith.constant 0 : i32
    return %arg0, %arg1, %c0_i32 : i32, i32, i32
  }
}

</mosaic_0001>

<llo_original>
// kernel: tpu_custom_call.1
$region0: #{tpu_custom_call.1}
  #allocation0 [shape = 'u32[]', space=smem, size = 0x4, offset = 0x4, fixed_abs, tag = 'smem constant byte address 0x4 - core index']
  #allocation1 [shape = 'u32[144,128]{1,0:T(1,128)}', space=vmem, size = 0x12000, scoped, tag = 'internal scratch']
  %s0 = inlined_call_operand.hbm [shape: f32[2,256,128], index: 0, kind: input, shape index: {}]
  %s1 = inlined_call_operand.hbm [shape: f32[2,256,128], index: 1, kind: input, shape index: {}]
  %s2 = inlined_call_operand.vmem [shape: f32[1,128], index: 2, kind: input, shape index: {}]
  %s3 = inlined_call_operand.vmem [shape: f32[1,128], index: 3, kind: input, shape index: {}]
  %s4 = inlined_call_operand.hbm [shape: bf16[128,256], index: 4, kind: input, shape index: {}]
  %s5 = inlined_call_operand.hbm [shape: f32[2,256,128], index: 5, kind: output, shape index: {0}]
  %s6 = inlined_call_operand.hbm [shape: bf16[2,256,128], index: 6, kind: output, shape index: {1}]
  %s7 = inlined_call_operand.hbm [shape: bf16[2,256,128], index: 7, kind: output, shape index: {2}]
  %8 = xla_tuple %s5, %s6, %s7
  %s9 = sld [smem:[#allocation0]]
  $region81: #{tpu_custom_call.1} parent=0
    _
  %s11 = ssub.s32 1, %s9
  %s12 = scalar_select 0, %s11, %s9
  $region1: #{tpu_custom_call.1} parent=0
    #allocation2 [shape = 'u8[131072]{0}', space=vmem, size = 0x20000, scoped, tag = 'input window, operand 0']
    #allocation3 [shape = 's32[2]{0}', space=sflag, size = 0x8, scoped, tag = 'scoped memory for tpu_custom_call.1']
    #allocation4 [shape = 's32[2]{0}', space=sflag, size = 0x8, scoped, tag = 'scoped memory for tpu_custom_call.1']
    #allocation5 [shape = 'u8[131072]{0}', space=vmem, size = 0x20000, scoped, tag = 'input window, operand 1']
    #allocation6 [shape = 's32[2]{0}', space=sflag, size = 0x8, scoped, tag = 'scoped memory for tpu_custom_call.1']
    #allocation7 [shape = 'u8[65536]{0}', space=vmem, size = 0x10000, scoped, tag = 'input window, operand 4, single buffered']
    #allocation8 [shape = 'u8[131072]{0}', space=vmem, size = 0x20000, scoped, tag = 'output window, operand 0']
    #allocation9 [shape = 'u8[65536]{0}', space=vmem, size = 0x10000, scoped, tag = 'output window, operand 1']
    #allocation10 [shape = 's32[2]{0}', space=sflag, size = 0x8, scoped, tag = 'scoped memory for tpu_custom_call.1']
    #allocation11 [shape = 'u8[65536]{0}', space=vmem, size = 0x10000, scoped, tag = 'output window, operand 2']
    %13 = vsyncpa [#allocation3], 0
    %s14 = scalar_lea.sflag [#allocation3], 1
    %15 = vsyncpa %s14, 0
    %16 = vsyncpa [#allocation6], 0
    %s17 = scalar_lea.sflag [#allocation6], 1
    %18 = vsyncpa %s17, 0
    %19 = vsyncpa [#allocation4], 0
    %s20 = scalar_lea.sflag [#allocation4], 1
    %21 = vsyncpa %s20, 0
    %22 = vsyncpa [#allocation10], 0
    %s23 = scalar_lea.sflag [#allocation10], 1
    %24 = vsyncpa %s23, 0
    loop: start=0, step=1, limit=6
    $region2: #{tpu_custom_call.1} parent=1 // loop_pre_header
      _
    $region3: #{tpu_custom_call.1} parent=1 // loop_header
      %s26 = sphi 0, %s30
      %p27 = scmp.ge.s32.totalorder %s26, 6
      %s33 = sphi 0, %s45
      %s34 = sphi 0, %s41
      %s35 = sphi 0, %s33
      %s36 = sphi 0, %s34
      %s37 = sphi 0, %s35
      %s38 = sphi 0, %s36
      %s50 = sphi 0, %s52
      %s53 = sphi 0, %s50
      %s54 = sphi 0, %s53
      %s70 = sphi 0, %s54
      %s78 = sphi 0, %s80
      %s81 = sphi 0, %s78
      %s82 = sphi 0, %s81
      %s98 = sphi 0, %s82
      %s102 = sphi 0, %s102
      %s104 = sphi 0, %s102
      %s105 = sphi 0, %s104
      %s119 = sphi 0, %s105
      %s123 = sphi 0, %s123
      %s125 = sphi 0, %s123
      %s126 = sphi 0, %s125
      %s140 = sphi 0, %s126
      %s144 = sphi 0, %s144
      %s146 = sphi 0, %s144
      %s147 = sphi 0, %s146
      %s161 = sphi 0, %s147
      %s169 = sphi 0, %s171
      %s172 = sphi 0, %s169
      %s173 = sphi 0, %s172
      %s189 = sphi 0, %s173
      %s197 = sphi 0, %s199
      %s200 = sphi 0, %s197
      %s201 = sphi 0, %s200
      %s217 = sphi 0, %s201
      %s225 = sphi 0, %s227
      %s228 = sphi 0, %s225
      %s229 = sphi 0, %s228
      %s245 = sphi 0, %s229
    $region4: #{tpu_custom_call.1} parent=1 // loop_header_branch
      %29 = sbr.rel (%p27) target = $region8
    $region5: #{tpu_custom_call.1} parent=1 // loop_body
      %s31 = ssub.s32 %s26, 1
      %s32 = ssub.s32 %s26, 2
      %s39 = sadd.s32 1, %s34
      %p40 = scmp.ge.s32.totalorder %s39, 2
      %s41 = scalar_select %p40, 0, %s39
      %s42 = sadd.s32 1, %s33
      %s43 = scalar_select %p40, %s42, %s33
      %p44 = scmp.ge.s32.totalorder %s43, 2
      %s45 = scalar_select %p44, 0, %s43
      %s46 = ssub.s32 %s33, %s45
      %s47 = ssub.s32 %s34, %s41
      %s48 = sor.u32 %s46, %s47
      %p49 = scmp.eq.s32.totalorder %s48, 0
      %s51 = sadd.s32 %s50, 1
      %s52 = scalar_select %p49, %s50, %s51
      %p55 = pneg %p49
      %p56 = scmp.eq.s32.totalorder %s26, 3
      %p57 = por %p55, %p56
      %p58 = scmp.ne.s32.totalorder %s50, %s53
      %p59 = scmp.eq.s32.totalorder %s26, 0
      %p60 = por %p58, %p59
      %p61 = scmp.ne.s32.totalorder %s50, %s53
      %p62 = scmp.eq.s32.totalorder %s31, 3
      %p63 = por %p61, %p62
      %p64 = scmp.ne.s32.totalorder %s53, %s54
      %p65 = scmp.eq.s32.totalorder %s31, 0
      %p66 = por %p64, %p65
      %p67 = scmp.ne.s32.totalorder %s53, %s54
      %p68 = scmp.eq.s32.totalorder %s32, 3
      %p69 = por %p67, %p68
      %p71 = scmp.ne.s32.totalorder %s54, %s70
      %p72 = scmp.eq.s32.totalorder %s32, 0
      %p73 = por %p71, %p72
      %s74 = ssub.s32 %s33, %s45
      %s75 = ssub.s32 %s34, %s41
      %s76 = sor.u32 %s74, %s75
      %p77 = scmp.eq.s32.totalorder %s76, 0
      %s79 = sadd.s32 %s78, 1
      %s80 = scalar_select %p77, %s78, %s79
      %p83 = pneg %p77
      %p84 = scmp.eq.s32.totalorder %s26, 3
      %p85 = por %p83, %p84
      %p86 = scmp.ne.s32.totalorder %s78, %s81
      %p87 = scmp.eq.s32.totalorder %s26, 0
      %p88 = por %p86, %p87
      %p89 = scmp.ne.s32.totalorder %s78, %s81
      %p90 = scmp.eq.s32.totalorder %s31, 3
      %p91 = por %p89, %p90
      %p92 = scmp.ne.s32.totalorder %s81, %s82
      %p93 = scmp.eq.s32.totalorder %s31, 0
      %p94 = por %p92, %p93
      %p95 = scmp.ne.s32.totalorder %s81, %s82
      %p96 = scmp.eq.s32.totalorder %s32, 3
      %p97 = por %p95, %p96
      %p99 = scmp.ne.s32.totalorder %s82, %s98
      %p100 = scmp.eq.s32.totalorder %s32, 0
      %p101 = por %p99, %p100
      %s103 = sadd.s32 %s102, 1
      %p106 = scmp.eq.s32.totalorder %s26, 3
      %p107 = scmp.ne.s32.totalorder %s102, %s104
      %p108 = scmp.eq.s32.totalorder %s26, 0
      %p109 = por %p107, %p108
      %p110 = scmp.ne.s32.totalorder %s102, %s104
      %p111 = scmp.eq.s32.totalorder %s31, 3
      %p112 = por %p110, %p111
      %p113 = scmp.ne.s32.totalorder %s104, %s105
      %p114 = scmp.eq.s32.totalorder %s31, 0
      %p115 = por %p113, %p114
      %p116 = scmp.ne.s32.totalorder %s104, %s105
      %p117 = scmp.eq.s32.totalorder %s32, 3
      %p118 = por %p116, %p117
      %p120 = scmp.ne.s32.totalorder %s105, %s119
      %p121 = scmp.eq.s32.totalorder %s32, 0
      %p122 = por %p120, %p121
      %s124 = sadd.s32 %s123, 1
      %p127 = scmp.eq.s32.totalorder %s26, 3
      %p128 = scmp.ne.s32.totalorder %s123, %s125
      %p129 = scmp.eq.s32.totalorder %s26, 0
      %p130 = por %p128, %p129
      %p131 = scmp.ne.s32.totalorder %s123, %s125
      %p132 = scmp.eq.s32.totalorder %s31, 3
      %p133 = por %p131, %p132
      %p134 = scmp.ne.s32.totalorder %s125, %s126
      %p135 = scmp.eq.s32.totalorder %s31, 0
      %p136 = por %p134, %p135
      %p137 = scmp.ne.s32.totalorder %s125, %s126
      %p138 = scmp.eq.s32.totalorder %s32, 3
      %p139 = por %p137, %p138
      %p141 = scmp.ne.s32.totalorder %s126, %s140
      %p142 = scmp.eq.s32.totalorder %s32, 0
      %p143 = por %p141, %p142
      %s145 = sadd.s32 %s144, 1
      %p148 = scmp.eq.s32.totalorder %s26, 3
      %p149 = scmp.ne.s32.totalorder %s144, %s146
      %p150 = scmp.eq.s32.totalorder %s26, 0
      %p151 = por %p149, %p150
      %p152 = scmp.ne.s32.totalorder %s144, %s146
      %p153 = scmp.eq.s32.totalorder %s31, 3
      %p154 = por %p152, %p153
      %p155 = scmp.ne.s32.totalorder %s146, %s147
      %p156 = scmp.eq.s32.totalorder %s31, 0
      %p157 = por %p155, %p156
      %p158 = scmp.ne.s32.totalorder %s146, %s147
      %p159 = scmp.eq.s32.totalorder %s32, 3
      %p160 = por %p158, %p159
      %p162 = scmp.ne.s32.totalorder %s147, %s161
      %p163 = scmp.eq.s32.totalorder %s32, 0
      %p164 = por %p162, %p163
      %s165 = ssub.s32 %s33, %s45
      %s166 = ssub.s32 %s34, %s41
      %s167 = sor.u32 %s165, %s166
      %p168 = scmp.eq.s32.totalorder %s167, 0
      %s170 = sadd.s32 %s169, 1
      %s171 = scalar_select %p168, %s169, %s170
      %p174 = pneg %p168
      %p175 = scmp.eq.s32.totalorder %s26, 3
      %p176 = por %p174, %p175
      %p177 = scmp.ne.s32.totalorder %s169, %s172
      %p178 = scmp.eq.s32.totalorder %s26, 0
      %p179 = por %p177, %p178
      %p180 = scmp.ne.s32.totalorder %s169, %s172
      %p181 = scmp.eq.s32.totalorder %s31, 3
      %p182 = por %p180, %p181
      %p183 = scmp.ne.s32.totalorder %s172, %s173
      %p184 = scmp.eq.s32.totalorder %s31, 0
      %p185 = por %p183, %p184
      %p186 = scmp.ne.s32.totalorder %s172, %s173
      %p187 = scmp.eq.s32.totalorder %s32, 3
      %p188 = por %p186, %p187
      %p190 = scmp.ne.s32.totalorder %s173, %s189
      %p191 = scmp.eq.s32.totalorder %s32, 0
      %p192 = por %p190, %p191
      %s193 = ssub.s32 %s33, %s45
      %s194 = ssub.s32 %s34, %s41
      %s195 = sor.u32 %s193, %s194
      %p196 = scmp.eq.s32.totalorder %s195, 0
      %s198 = sadd.s32 %s197, 1
      %s199 = scalar_select %p196, %s197, %s198
      %p202 = pneg %p196
      %p203 = scmp.eq.s32.totalorder %s26, 3
      %p204 = por %p202, %p203
      %p205 = scmp.ne.s32.totalorder %s197, %s200
      %p206 = scmp.eq.s32.totalorder %s26, 0
      %p207 = por %p205, %p206
      %p208 = scmp.ne.s32.totalorder %s197, %s200
      %p209 = scmp.eq.s32.totalorder %s31, 3
      %p210 = por %p208, %p209
      %p211 = scmp.ne.s32.totalorder %s200, %s201
      %p212 = scmp.eq.s32.totalorder %s31, 0
      %p213 = por %p211, %p212
      %p214 = scmp.ne.s32.totalorder %s200, %s201
      %p215 = scmp.eq.s32.totalorder %s32, 3
      %p216 = por %p214, %p215
      %p218 = scmp.ne.s32.totalorder %s201, %s217
      %p219 = scmp.eq.s32.totalorder %s32, 0
      %p220 = por %p218, %p219
      %s221 = ssub.s32 %s33, %s45
      %s222 = ssub.s32 %s34, %s41
      %s223 = sor.u32 %s221, %s222
      %p224 = scmp.eq.s32.totalorder %s223, 0
      %s226 = sadd.s32 %s225, 1
      %s227 = scalar_select %p224, %s225, %s226
      %p230 = pneg %p224
      %p231 = scmp.eq.s32.totalorder %s26, 3
      %p232 = por %p230, %p231
      %p233 = scmp.ne.s32.totalorder %s225, %s228
      %p234 = scmp.eq.s32.totalorder %s26, 0
      %p235 = por %p233, %p234
      %p236 = scmp.ne.s32.totalorder %s225, %s228
      %p237 = scmp.eq.s32.totalorder %s31, 3
      %p238 = por %p236, %p237
      %p239 = scmp.ne.s32.totalorder %s228, %s229
      %p240 = scmp.eq.s32.totalorder %s31, 0
      %p241 = por %p239, %p240
      %p242 = scmp.ne.s32.totalorder %s228, %s229
      %p243 = scmp.eq.s32.totalorder %s32, 3
      %p244 = por %p242, %p243
      %p246 = scmp.ne.s32.totalorder %s229, %s245
      %p247 = scmp.eq.s32.totalorder %s32, 0
      %p248 = por %p246, %p247
      %p249 = scmp.le.s32.totalorder 1, %s26
      %p250 = scmp.lt.s32.totalorder %s26, 5
      %p251 = pnand %p249, %p250
      %p252 = pneg %p251
      // Predicated region
      $region9: #{tpu_custom_call.1} parent=5 // pred_check
        _
      $region10: #{tpu_custom_call.1} parent=5 // pred_check_branch
        %254 = sbr.rel (%p251) target = $region12
      $region11: #{tpu_custom_call.1} parent=5 // pred_region
        %s255 = ssub.s32 %s26, 1
        // Predicated region
        $region13: #{tpu_custom_call.1} parent=11 // pred_check
          %p256 = pneg %p115
        $region14: #{tpu_custom_call.1} parent=11 // pred_check_branch
          %258 = sbr.rel (%p256) target = $region16
        $region15: #{tpu_custom_call.1} parent=11 // pred_region
          _
        $region16: #{tpu_custom_call.1} parent=11 // pred_fallthru
          _
        // Predicated region
        $region17: #{tpu_custom_call.1} parent=11 // pred_check
          %p259 = pneg %p136
        $region18: #{tpu_custom_call.1} parent=11 // pred_check_branch
          %261 = sbr.rel (%p259) target = $region20
        $region19: #{tpu_custom_call.1} parent=11 // pred_region
          _
        $region20: #{tpu_custom_call.1} parent=11 // pred_fallthru
          _
        // Predicated region
        $region21: #{tpu_custom_call.1} parent=11 // pred_check
          %p262 = pneg %p157
        $region22: #{tpu_custom_call.1} parent=11 // pred_check_branch
          %264 = sbr.rel (%p262) target = $region24
        $region23: #{tpu_custom_call.1} parent=11 // pred_region
          %s266 = ssub.s32 2048, 2048
          %267 = vsyncadd [#allocation6], %s266
          %s268 = sshll.u32 [#allocation7], 4
          %s269 = int_to_ptr.vmem [resolvable:$true] %s268
          %274 = dma.hbm_to_vmem [thread:$0]  %s4, 2048, %s269, [#allocation6], 128, 128, 8
        $region24: #{tpu_custom_call.1} parent=11 // pred_fallthru
          _
      $region12: #{tpu_custom_call.1} parent=5 // pred_fallthru
        _
      %p275 = scmp.lt.s32.totalorder %s26, 4
      // Predicated region
      $region25: #{tpu_custom_call.1} parent=5 // pred_check
        %p276 = pneg %p275
      $region26: #{tpu_custom_call.1} parent=5 // pred_check_branch
        %278 = sbr.rel (%p276) target = $region28
      $region27: #{tpu_custom_call.1} parent=5 // pred_region
        // Predicated region
        $region29: #{tpu_custom_call.1} parent=27 // pred_check
          %p279 = pneg %p60
        $region30: #{tpu_custom_call.1} parent=27 // pred_check_branch
          %281 = sbr.rel (%p279) target = $region32
        $region31: #{tpu_custom_call.1} parent=27 // pred_region
          %s282 = sand.u32 %s50, 1
          %s283 = scalar_lea.sflag [#allocation3], %s282
          %s284 = sand.u32 %s50, 1
          %s285 = smul.addr %s284, 128
          %s286 = scalar_lea.vmem [#allocation2], %s285
          %s287 = smul.u32 16, %s34
          %s289 = ssub.s32 2048, 2048
          %290 = vsyncadd %s283, %s289
          %s291 = smul.addr %s33, 32
          %s292 = sadd.s32 %s287, %s291
          %s293 = smul.addr %s292, 128
          %s294 = scalar_lea.hbm %s0, %s293
          %s295 = sshll.u32 %s286, 4
          %s296 = int_to_ptr.vmem [resolvable:$true] %s295
          %301 = dma.hbm_to_vmem [thread:$0]  %s294, 2048, %s296, %s283, 128, 128, 8
        $region32: #{tpu_custom_call.1} parent=27 // pred_fallthru
          _
        // Predicated region
        $region33: #{tpu_custom_call.1} parent=27 // pred_check
          %p302 = pneg %p88
        $region34: #{tpu_custom_call.1} parent=27 // pred_check_branch
          %304 = sbr.rel (%p302) target = $region36
        $region35: #{tpu_custom_call.1} parent=27 // pred_region
          %s305 = sand.u32 %s26, 1
          %s306 = scalar_lea.sflag [#allocation6], %s305
          %s307 = sand.u32 %s78, 1
          %s308 = smul.addr %s307, 128
          %s309 = scalar_lea.vmem [#allocation5], %s308
          %s310 = smul.u32 16, %s34
          %s312 = ssub.s32 2048, 2048
          %313 = vsyncadd %s306, %s312
          %s314 = smul.addr %s33, 32
          %s315 = sadd.s32 %s310, %s314
          %s316 = smul.addr %s315, 128
          %s317 = scalar_lea.hbm %s1, %s316
          %s318 = sshll.u32 %s309, 4
          %s319 = int_to_ptr.vmem [resolvable:$true] %s318
          %324 = dma.hbm_to_vmem [thread:$0]  %s317, 2048, %s319, %s306, 128, 128, 8
        $region36: #{tpu_custom_call.1} parent=27 // pred_fallthru
          _
      $region28: #{tpu_custom_call.1} parent=5 // pred_fallthru
        _
      %p325 = scmp.le.s32.totalorder 1, %s26
      %p326 = scmp.lt.s32.totalorder %s26, 5
      %p327 = pnand %p325, %p326
      %p328 = pneg %p327
      // Predicated region
      $region37: #{tpu_custom_call.1} parent=5 // pred_check
        _
      $region38: #{tpu_custom_call.1} parent=5 // pred_check_branch
        %330 = sbr.rel (%p327) target = $region40
      $region39: #{tpu_custom_call.1} parent=5 // pred_region
        %s331 = ssub.s32 %s26, 1
        %s332 = sand.u32 %s53, 1
        %s333 = scalar_lea.sflag [#allocation3], %s332
        %s334 = sand.u32 %s53, 1
        %s335 = smul.addr %s334, 128
        %s336 = scalar_lea.vmem [#allocation2], %s335
        // Predicated region
        $region41: #{tpu_custom_call.1} parent=39 // pred_check
          %p337 = pneg %p66
        $region42: #{tpu_custom_call.1} parent=39 // pred_check_branch
          %339 = sbr.rel (%p337) target = $region44
        $region43: #{tpu_custom_call.1} parent=39 // pred_region
          %340 = dma.done %s333, 2048
        $region44: #{tpu_custom_call.1} parent=39 // pred_fallthru
          _
        %s341 = sand.u32 %s31, 1
        %s342 = scalar_lea.sflag [#allocation6], %s341
        %s343 = sand.u32 %s81, 1
        %s344 = smul.addr %s343, 128
        %s345 = scalar_lea.vmem [#allocation5], %s344
        // Predicated region
        $region45: #{tpu_custom_call.1} parent=39 // pred_check
          %p346 = pneg %p94
        $region46: #{tpu_custom_call.1} parent=39 // pred_check_branch
          %348 = sbr.rel (%p346) target = $region48
        $region47: #{tpu_custom_call.1} parent=39 // pred_region
          %349 = dma.done %s342, 2048
        $region48: #{tpu_custom_call.1} parent=39 // pred_fallthru
          _
        // Predicated region
        $region49: #{tpu_custom_call.1} parent=39 // pred_check
          %p350 = pneg %p157
        $region50: #{tpu_custom_call.1} parent=39 // pred_check_branch
          %352 = sbr.rel (%p350) target = $region52
        $region51: #{tpu_custom_call.1} parent=39 // pred_region
          %353 = dma.done [#allocation6], 2048
        $region52: #{tpu_custom_call.1} parent=39 // pred_fallthru
          _
        %s354 = sand.u32 %s53, 1
        %s355 = scalar_lea.sflag [#allocation3], %s354
        %s356 = sand.u32 %s53, 1
        %s357 = smul.addr %s356, 128
        %s358 = scalar_lea.vmem [#allocation2], %s357
        %p359 = pneg %p66
        %p360 = pneg %p63
        %s361 = sand.u32 %s31, 1
        %s362 = scalar_lea.sflag [#allocation6], %s361
        %s363 = sand.u32 %s81, 1
        %s364 = smul.addr %s363, 128
        %s365 = scalar_lea.vmem [#allocation5], %s364
        %p366 = pneg %p94
        %p367 = pneg %p91
        %p368 = pneg %p115
        %p369 = pneg %p112
        %p370 = pneg %p136
        %p371 = pneg %p133
        %p372 = pneg %p157
        %p373 = pneg %p154
        %p374 = pneg %p185
        %p375 = pneg %p182
        %s376 = sand.u32 %s172, 1
        %s377 = scalar_lea.sflag [#allocation4], %s376
        %s378 = sand.u32 %s172, 1
        %s379 = smul.addr %s378, 128
        %s380 = scalar_lea.vmem [#allocation8], %s379
        %p381 = pneg %p213
        %p382 = pneg %p210
        %s383 = sand.u32 %s31, 1
        %s384 = scalar_lea.sflag [#allocation10], %s383
        %s385 = sand.u32 %s200, 1
        %s386 = smul.addr %s385, 64
        %s387 = scalar_lea.vmem [#allocation9], %s386
        %p388 = pneg %p241
        %p389 = pneg %p238
        %s390 = sand.u32 %s31, 1
        %s391 = scalar_lea.sflag [#allocation10], %s390
        %s392 = sand.u32 %s228, 1
        %s393 = smul.addr %s392, 64
        %s394 = scalar_lea.vmem [#allocation11], %s393
        %s395 = smul.u32 16, %s36
        %s396 = smul.u32 16, %s36
        %s397 = smul.u32 16, %s36
        %s398 = smul.u32 16, %s36
        %s399 = smul.u32 16, %s36
        %v401 = vld [vmem:[%s336] sm:$0xff]
        %v402 = vld [vmem:[%s336 + $0x8] sm:$0xff]
        %v403 = vld [vmem:[%s336 + $0x10] sm:$0xff]
        %v404 = vld [vmem:[%s336 + $0x18] sm:$0xff]
        %v405 = vld [vmem:[%s336 + $0x20] sm:$0xff]
        %v406 = vld [vmem:[%s336 + $0x28] sm:$0xff]
        %v407 = vld [vmem:[%s336 + $0x30] sm:$0xff]
        %v408 = vld [vmem:[%s336 + $0x38] sm:$0xff]
        %v409 = vld [vmem:[%s336 + $0x40] sm:$0xff]
        %v410 = vld [vmem:[%s336 + $0x48] sm:$0xff]
        %v411 = vld [vmem:[%s336 + $0x50] sm:$0xff]
        %v412 = vld [vmem:[%s336 + $0x58] sm:$0xff]
        %v413 = vld [vmem:[%s336 + $0x60] sm:$0xff]
        %v414 = vld [vmem:[%s336 + $0x68] sm:$0xff]
        %v415 = vld [vmem:[%s336 + $0x70] sm:$0xff]
        %v416 = vld [vmem:[%s336 + $0x78] sm:$0xff]
        %v417 = vld [vmem:[%s345] sm:$0xff]
        %v418 = vld [vmem:[%s345 + $0x8] sm:$0xff]
        %v419 = vld [vmem:[%s345 + $0x10] sm:$0xff]
        %v420 = vld [vmem:[%s345 + $0x18] sm:$0xff]
        %v421 = vld [vmem:[%s345 + $0x20] sm:$0xff]
        %v422 = vld [vmem:[%s345 + $0x28] sm:$0xff]
        %v423 = vld [vmem:[%s345 + $0x30] sm:$0xff]
        %v424 = vld [vmem:[%s345 + $0x38] sm:$0xff]
        %v425 = vld [vmem:[%s345 + $0x40] sm:$0xff]
        %v426 = vld [vmem:[%s345 + $0x48] sm:$0xff]
        %v427 = vld [vmem:[%s345 + $0x50] sm:$0xff]
        %v428 = vld [vmem:[%s345 + $0x58] sm:$0xff]
        %v429 = vld [vmem:[%s345 + $0x60] sm:$0xff]
        %v430 = vld [vmem:[%s345 + $0x68] sm:$0xff]
        %v431 = vld [vmem:[%s345 + $0x70] sm:$0xff]
        %v432 = vld [vmem:[%s345 + $0x78] sm:$0xff]
        %v433 = vadd.f32 %v401, %v417
        %v434 = vadd.f32 %v402, %v418
        %v435 = vadd.f32 %v403, %v419
        %v436 = vadd.f32 %v404, %v420
        %v437 = vadd.f32 %v405, %v421
        %v438 = vadd.f32 %v406, %v422
        %v439 = vadd.f32 %v407, %v423
        %v440 = vadd.f32 %v408, %v424
        %v441 = vadd.f32 %v409, %v425
        %v442 = vadd.f32 %v410, %v426
        %v443 = vadd.f32 %v411, %v427
        %v444 = vadd.f32 %v412, %v428
        %v445 = vadd.f32 %v413, %v429
        %v446 = vadd.f32 %v414, %v430
        %v447 = vadd.f32 %v415, %v431
        %v448 = vadd.f32 %v416, %v432
        %449 = vst [vmem:[%s380] sm:$0xff] %v433
        %450 = vst [vmem:[%s380 + $0x8] sm:$0xff] %v434
        %451 = vst [vmem:[%s380 + $0x10] sm:$0xff] %v435
        %452 = vst [vmem:[%s380 + $0x18] sm:$0xff] %v436
        %453 = vst [vmem:[%s380 + $0x20] sm:$0xff] %v437
        %454 = vst [vmem:[%s380 + $0x28] sm:$0xff] %v438
        %455 = vst [vmem:[%s380 + $0x30] sm:$0xff] %v439
        %456 = vst [vmem:[%s380 + $0x38] sm:$0xff] %v440
        %457 = vst [vmem:[%s380 + $0x40] sm:$0xff] %v441
        %458 = vst [vmem:[%s380 + $0x48] sm:$0xff] %v442
        %459 = vst [vmem:[%s380 + $0x50] sm:$0xff] %v443
        %460 = vst [vmem:[%s380 + $0x58] sm:$0xff] %v444
        %461 = vst [vmem:[%s380 + $0x60] sm:$0xff] %v445
        %462 = vst [vmem:[%s380 + $0x68] sm:$0xff] %v446
        %463 = vst [vmem:[%s380 + $0x70] sm:$0xff] %v447
        %464 = vst [vmem:[%s380 + $0x78] sm:$0xff] %v448
        %v465 = vld [vmem:[%s2] sm:$0x1]
        %v466 = vld [vmem:[%s3] sm:$0x1]
        %467 = vadd.xlane.f32.xlu0 %v433
        %v468 = vpop.xlane.xlu0 %467
        %469 = vadd.xlane.f32.xlu0 %v434
        %v470 = vpop.xlane.xlu0 %469
        %471 = vadd.xlane.f32.xlu0 %v435
        %v472 = vpop.xlane.xlu0 %471
        %473 = vadd.xlane.f32.xlu0 %v436
        %v474 = vpop.xlane.xlu0 %473
        %475 = vadd.xlane.f32.xlu0 %v437
        %v476 = vpop.xlane.xlu0 %475
        %477 = vadd.xlane.f32.xlu0 %v438
        %v478 = vpop.xlane.xlu0 %477
        %479 = vadd.xlane.f32.xlu0 %v439
        %v480 = vpop.xlane.xlu0 %479
        %481 = vadd.xlane.f32.xlu0 %v440
        %v482 = vpop.xlane.xlu0 %481
        %483 = vadd.xlane.f32.xlu0 %v441
        %v484 = vpop.xlane.xlu0 %483
        %485 = vadd.xlane.f32.xlu0 %v442
        %v486 = vpop.xlane.xlu0 %485
        %487 = vadd.xlane.f32.xlu0 %v443
        %v488 = vpop.xlane.xlu0 %487
        %489 = vadd.xlane.f32.xlu0 %v444
        %v490 = vpop.xlane.xlu0 %489
        %491 = vadd.xlane.f32.xlu0 %v445
        %v492 = vpop.xlane.xlu0 %491
        %493 = vadd.xlane.f32.xlu0 %v446
        %v494 = vpop.xlane.xlu0 %493
        %495 = vadd.xlane.f32.xlu0 %v447
        %v496 = vpop.xlane.xlu0 %495
        %497 = vadd.xlane.f32.xlu0 %v448
        %v498 = vpop.xlane.xlu0 %497
        %v499 = vrcp.pop 128.0
        %v500 = vmul.f32 %v468, %v499
        %v501 = vmul.f32 %v470, %v499
        %v502 = vmul.f32 %v472, %v499
        %v503 = vmul.f32 %v474, %v499
        %v504 = vmul.f32 %v476, %v499
        %v505 = vmul.f32 %v478, %v499
        %v506 = vmul.f32 %v480, %v499
        %v507 = vmul.f32 %v482, %v499
        %v508 = vmul.f32 %v484, %v499
        %v509 = vmul.f32 %v486, %v499
        %v510 = vmul.f32 %v488, %v499
        %v511 = vmul.f32 %v490, %v499
        %v512 = vmul.f32 %v492, %v499
        %v513 = vmul.f32 %v494, %v499
        %v514 = vmul.f32 %v496, %v499
        %v515 = vmul.f32 %v498, %v499
        %v516 = vsub.f32 %v433, %v500
        %v517 = vsub.f32 %v434, %v501
        %v518 = vsub.f32 %v435, %v502
        %v519 = vsub.f32 %v436, %v503
        %v520 = vsub.f32 %v437, %v504
        %v521 = vsub.f32 %v438, %v505
        %v522 = vsub.f32 %v439, %v506
        %v523 = vsub.f32 %v440, %v507
        %v524 = vsub.f32 %v441, %v508
        %v525 = vsub.f32 %v442, %v509
        %v526 = vsub.f32 %v443, %v510
        %v527 = vsub.f32 %v444, %v511
        %v528 = vsub.f32 %v445, %v512
        %v529 = vsub.f32 %v446, %v513
        %v530 = vsub.f32 %v447, %v514
        %v531 = vsub.f32 %v448, %v515
        %v532 = vmul.f32 %v516, %v516
        %v533 = vmul.f32 %v517, %v517
        %v534 = vmul.f32 %v518, %v518
        %v535 = vmul.f32 %v519, %v519
        %v536 = vmul.f32 %v520, %v520
        %v537 = vmul.f32 %v521, %v521
        %v538 = vmul.f32 %v522, %v522
        %v539 = vmul.f32 %v523, %v523
        %v540 = vmul.f32 %v524, %v524
        %v541 = vmul.f32 %v525, %v525
        %v542 = vmul.f32 %v526, %v526
        %v543 = vmul.f32 %v527, %v527
        %v544 = vmul.f32 %v528, %v528
        %v545 = vmul.f32 %v529, %v529
        %v546 = vmul.f32 %v530, %v530
        %v547 = vmul.f32 %v531, %v531
        %548 = vadd.xlane.f32.xlu0 %v532
        %v549 = vpop.xlane.xlu0 %548
        %550 = vadd.xlane.f32.xlu0 %v533
        %v551 = vpop.xlane.xlu0 %550
        %552 = vadd.xlane.f32.xlu0 %v534
        %v553 = vpop.xlane.xlu0 %552
        %554 = vadd.xlane.f32.xlu0 %v535
        %v555 = vpop.xlane.xlu0 %554
        %556 = vadd.xlane.f32.xlu0 %v536
        %v557 = vpop.xlane.xlu0 %556
        %558 = vadd.xlane.f32.xlu0 %v537
        %v559 = vpop.xlane.xlu0 %558
        %560 = vadd.xlane.f32.xlu0 %v538
        %v561 = vpop.xlane.xlu0 %560
        %562 = vadd.xlane.f32.xlu0 %v539
        %v563 = vpop.xlane.xlu0 %562
        %564 = vadd.xlane.f32.xlu0 %v540
        %v565 = vpop.xlane.xlu0 %564
        %566 = vadd.xlane.f32.xlu0 %v541
        %v567 = vpop.xlane.xlu0 %566
        %568 = vadd.xlane.f32.xlu0 %v542
        %v569 = vpop.xlane.xlu0 %568
        %570 = vadd.xlane.f32.xlu0 %v543
        %v571 = vpop.xlane.xlu0 %570
        %572 = vadd.xlane.f32.xlu0 %v544
        %v573 = vpop.xlane.xlu0 %572
        %574 = vadd.xlane.f32.xlu0 %v545
        %v575 = vpop.xlane.xlu0 %574
        %576 = vadd.xlane.f32.xlu0 %v546
        %v577 = vpop.xlane.xlu0 %576
        %578 = vadd.xlane.f32.xlu0 %v547
        %v579 = vpop.xlane.xlu0 %578
        %v580 = vmul.f32 %v549, %v499
        %v581 = vmul.f32 %v551, %v499
        %v582 = vmul.f32 %v553, %v499
        %v583 = vmul.f32 %v555, %v499
        %v584 = vmul.f32 %v557, %v499
        %v585 = vmul.f32 %v559, %v499
        %v586 = vmul.f32 %v561, %v499
        %v587 = vmul.f32 %v563, %v499
        %v588 = vmul.f32 %v565, %v499
        %v589 = vmul.f32 %v567, %v499
        %v590 = vmul.f32 %v569, %v499
        %v591 = vmul.f32 %v571, %v499
        %v592 = vmul.f32 %v573, %v499
        %v593 = vmul.f32 %v575, %v499
        %v594 = vmul.f32 %v577, %v499
        %v595 = vmul.f32 %v579, %v499
        %v596 = vadd.f32 %v580, 1e-05
        %v597 = vadd.f32 %v581, 1e-05
        %v598 = vadd.f32 %v582, 1e-05
        %v599 = vadd.f32 %v583, 1e-05
        %v600 = vadd.f32 %v584, 1e-05
        %v601 = vadd.f32 %v585, 1e-05
        %v602 = vadd.f32 %v586, 1e-05
        %v603 = vadd.f32 %v587, 1e-05
        %v604 = vadd.f32 %v588, 1e-05
        %v605 = vadd.f32 %v589, 1e-05
        %v606 = vadd.f32 %v590, 1e-05
        %v607 = vadd.f32 %v591, 1e-05
        %v608 = vadd.f32 %v592, 1e-05
        %v609 = vadd.f32 %v593, 1e-05
        %v610 = vadd.f32 %v594, 1e-05
        %v611 = vadd.f32 %v595, 1e-05
        %v612 = vrsqrt.pop %v596
        %v613 = vrsqrt.pop %v597
        %v614 = vrsqrt.pop %v598
        %v615 = vrsqrt.pop %v599
        %v616 = vrsqrt.pop %v600
        %v617 = vrsqrt.pop %v601
        %v618 = vrsqrt.pop %v602
        %v619 = vrsqrt.pop %v603
        %v620 = vrsqrt.pop %v604
        %v621 = vrsqrt.pop %v605
        %v622 = vrsqrt.pop %v606
        %v623 = vrsqrt.pop %v607
        %v624 = vrsqrt.pop %v608
        %v625 = vrsqrt.pop %v609
        %v626 = vrsqrt.pop %v610
        %v627 = vrsqrt.pop %v611
        %v628 = vmul.f32 %v516, %v612
        %v629 = vmul.f32 %v517, %v613
        %v630 = vmul.f32 %v518, %v614
        %v631 = vmul.f32 %v519, %v615
        %v632 = vmul.f32 %v520, %v616
        %v633 = vmul.f32 %v521, %v617
        %v634 = vmul.f32 %v522, %v618
        %v635 = vmul.f32 %v523, %v619
        %v636 = vmul.f32 %v524, %v620
        %v637 = vmul.f32 %v525, %v621
        %v638 = vmul.f32 %v526, %v622
        %v639 = vmul.f32 %v527, %v623
        %v640 = vmul.f32 %v528, %v624
        %v641 = vmul.f32 %v529, %v625
        %v642 = vmul.f32 %v530, %v626
        %v643 = vmul.f32 %v531, %v627
        %v645 = vlaneseq
        %v646 = vshrl.u32 %v645, 7
        %v647 = vsub.s32 0, %v646
        %v648 = vrot.slane %v465, %v647
        %v650 = vmul.f32 %v628, %v648
        %v651 = vmul.f32 %v629, %v648
        %v652 = vmul.f32 %v630, %v648
        %v653 = vmul.f32 %v631, %v648
        %v654 = vmul.f32 %v632, %v648
        %v655 = vmul.f32 %v633, %v648
        %v656 = vmul.f32 %v634, %v648
        %v657 = vmul.f32 %v635, %v648
        %v658 = vmul.f32 %v636, %v648
        %v659 = vmul.f32 %v637, %v648
        %v660 = vmul.f32 %v638, %v648
        %v661 = vmul.f32 %v639, %v648
        %v662 = vmul.f32 %v640, %v648
        %v663 = vmul.f32 %v641, %v648
        %v664 = vmul.f32 %v642, %v648
        %v665 = vmul.f32 %v643, %v648
        %v667 = vlaneseq
        %v668 = vshrl.u32 %v667, 7
        %v669 = vsub.s32 0, %v668
        %v670 = vrot.slane %v466, %v669
        %v672 = vadd.f32 %v650, %v670
        %v673 = vadd.f32 %v651, %v670
        %v674 = vadd.f32 %v652, %v670
        %v675 = vadd.f32 %v653, %v670
        %v676 = vadd.f32 %v654, %v670
        %v677 = vadd.f32 %v655, %v670
        %v678 = vadd.f32 %v656, %v670
        %v679 = vadd.f32 %v657, %v670
        %v680 = vadd.f32 %v658, %v670
        %v681 = vadd.f32 %v659, %v670
        %v682 = vadd.f32 %v660, %v670
        %v683 = vadd.f32 %v661, %v670
        %v684 = vadd.f32 %v662, %v670
        %v685 = vadd.f32 %v663, %v670
        %v686 = vadd.f32 %v664, %v670
        %v687 = vadd.f32 %v665, %v670
        %v688 = vpack.c.bf16 %v673, %v672
        %v689 = vpack.c.bf16 %v675, %v674
        %v690 = vpack.c.bf16 %v677, %v676
        %v691 = vpack.c.bf16 %v679, %v678
        %v692 = vpack.c.bf16 %v681, %v680
        %v693 = vpack.c.bf16 %v683, %v682
        %v694 = vpack.c.bf16 %v685, %v684
        %v695 = vpack.c.bf16 %v687, %v686
        %v696 = vld [vmem:[#allocation7] sm:$0xff]
        %v697 = vld [vmem:[#allocation7 + $0x8] sm:$0xff]
        %v698 = vld [vmem:[#allocation7 + $0x10] sm:$0xff]
        %v699 = vld [vmem:[#allocation7 + $0x18] sm:$0xff]
        %v700 = vld [vmem:[#allocation7 + $0x20] sm:$0xff]
        %v701 = vld [vmem:[#allocation7 + $0x28] sm:$0xff]
        %v702 = vld [vmem:[#allocation7 + $0x30] sm:$0xff]
        %v703 = vld [vmem:[#allocation7 + $0x38] sm:$0xff]
        %v704 = vld [vmem:[#allocation7 + $0x40] sm:$0xff]
        %v705 = vld [vmem:[#allocation7 + $0x48] sm:$0xff]
        %v706 = vld [vmem:[#allocation7 + $0x50] sm:$0xff]
        %v707 = vld [vmem:[#allocation7 + $0x58] sm:$0xff]
        %v708 = vld [vmem:[#allocation7 + $0x60] sm:$0xff]
        %v709 = vld [vmem:[#allocation7 + $0x68] sm:$0xff]
        %v710 = vld [vmem:[#allocation7 + $0x70] sm:$0xff]
        %v711 = vld [vmem:[#allocation7 + $0x78] sm:$0xff]
        %v728 = vunpack.c.l.b16 %v696
        %v729 = vunpack.c.h.b16 %v696
        %v730 = vunpack.c.l.b16 %v697
        %v731 = vunpack.c.h.b16 %v697
        %v732 = vunpack.c.l.b16 %v698
        %v733 = vunpack.c.h.b16 %v698
        %v734 = vunpack.c.l.b16 %v699
        %v735 = vunpack.c.h.b16 %v699
        %v736 = vunpack.c.l.b16 %v700
        %v737 = vunpack.c.h.b16 %v700
        %v738 = vunpack.c.l.b16 %v701
        %v739 = vunpack.c.h.b16 %v701
        %v740 = vunpack.c.l.b16 %v702
        %v741 = vunpack.c.h.b16 %v702
        %v742 = vunpack.c.l.b16 %v703
        %v743 = vunpack.c.h.b16 %v703
        %v744 = vunpack.c.l.b16 %v704
        %v745 = vunpack.c.h.b16 %v704
        %v746 = vunpack.c.l.b16 %v705
        %v747 = vunpack.c.h.b16 %v705
        %v748 = vunpack.c.l.b16 %v706
        %v749 = vunpack.c.h.b16 %v706
        %v750 = vunpack.c.l.b16 %v707
        %v751 = vunpack.c.h.b16 %v707
        %v752 = vunpack.c.l.b16 %v708
        %v753 = vunpack.c.h.b16 %v708
        %v754 = vunpack.c.l.b16 %v709
        %v755 = vunpack.c.h.b16 %v709
        %v756 = vunpack.c.l.b16 %v710
        %v757 = vunpack.c.h.b16 %v710
        %v758 = vunpack.c.l.b16 %v711
        %v759 = vunpack.c.h.b16 %v711
        %v760 = vpack.c.b16 %v730, %v728
        %v761 = vpack.c.b16 %v731, %v729
        %v762 = vpack.c.b16 %v734, %v732
        %v763 = vpack.c.b16 %v735, %v733
        %v764 = vpack.c.b16 %v738, %v736
        %v765 = vpack.c.b16 %v739, %v737
        %v766 = vpack.c.b16 %v742, %v740
        %v767 = vpack.c.b16 %v743, %v741
        %v768 = vpack.c.b16 %v746, %v744
        %v769 = vpack.c.b16 %v747, %v745
        %v770 = vpack.c.b16 %v750, %v748
        %v771 = vpack.c.b16 %v751, %v749
        %v772 = vpack.c.b16 %v754, %v752
        %v773 = vpack.c.b16 %v755, %v753
        %v774 = vpack.c.b16 %v758, %v756
        %v775 = vpack.c.b16 %v759, %v757
        %792 = vmatprep.subr.bf16.mxu0 %v775
        %793 = vmatpush1.bf16.msra.mxu0 %v774
        %794 = vmatprep.subr.bf16.mxu0 %v773
        %795 = vmatpush1.bf16.msra.mxu0 %v772
        %796 = vmatprep.subr.bf16.mxu0 %v771
        %797 = vmatpush1.bf16.msra.mxu0 %v770
        %798 = vmatprep.subr.bf16.mxu0 %v769
        %799 = vmatpush1.bf16.msra.mxu0 %v768
        %800 = vmatprep.subr.bf16.mxu0 %v767
        %801 = vmatpush1.bf16.msra.mxu0 %v766
        %802 = vmatprep.subr.bf16.mxu0 %v765
        %803 = vmatpush1.bf16.msra.mxu0 %v764
        %804 = vmatprep.subr.bf16.mxu0 %v763
        %805 = vmatpush1.bf16.msra.mxu0 %v762
        %806 = vmatprep.subr.bf16.mxu0 %v761
        %807 = vmatpush1.bf16.msra.mxu0 %v760
        %808 = vmatprep.subr.bf16.mxu0 0
        %809 = vmatpush2.bf16.msra.mxu0 0
        %810 = vmatprep.subr.bf16.mxu0 0
        %811 = vmatpush2.bf16.msra.mxu0 0
        %812 = vmatprep.subr.bf16.mxu0 0
        %813 = vmatpush2.bf16.msra.mxu0 0
        %814 = vmatprep.subr.bf16.mxu0 0
        %815 = vmatpush2.bf16.msra.mxu0 0
        %816 = vmatprep.subr.bf16.mxu0 0
        %817 = vmatpush2.bf16.msra.mxu0 0
        %818 = vmatprep.subr.bf16.mxu0 0
        %819 = vmatpush2.bf16.msra.mxu0 0
        %820 = vmatprep.subr.bf16.mxu0 0
        %821 = vmatpush2.bf16.msra.mxu0 0
        %822 = vmatprep.subr.bf16.mxu0 0
        %823 = vmatpush2.bf16.msra.mxu0 0
        %824 = vmatprep.mubr.bf16.mxu0 0
        %825 = vmatmul.mubr.bf16.gmra.mxu0 %v688
        %v826 = vpop.f32.mrf.mxu0
        %v827 = vadd.f32 0.0, %v826
        %v828 = vpop.f32.mrf.mxu0
        %v829 = vadd.f32 0.0, %v828
        %v830 = vpop.f32.mrf.mxu0
        %v831 = vadd.f32 0.0, %v830
        %v832 = vpop.f32.mrf.mxu0
        %v833 = vadd.f32 0.0, %v832
        %834 = vmatprep.mubr.bf16.mxu0 0
        %835 = vmatmul.mubr.bf16.gmra.mxu0 %v689
        %v836 = vpop.f32.mrf.mxu0
        %v837 = vadd.f32 0.0, %v836
        %v838 = vpop.f32.mrf.mxu0
        %v839 = vadd.f32 0.0, %v838
        %v840 = vpop.f32.mrf.mxu0
        %v841 = vadd.f32 0.0, %v840
        %v842 = vpop.f32.mrf.mxu0
        %v843 = vadd.f32 0.0, %v842
        %844 = vmatprep.mubr.bf16.mxu0 0
        %845 = vmatmul.mubr.bf16.gmra.mxu0 %v690
        %v846 = vpop.f32.mrf.mxu0
        %v847 = vadd.f32 0.0, %v846
        %v848 = vpop.f32.mrf.mxu0
        %v849 = vadd.f32 0.0, %v848
        %v850 = vpop.f32.mrf.mxu0
        %v851 = vadd.f32 0.0, %v850
        %v852 = vpop.f32.mrf.mxu0
        %v853 = vadd.f32 0.0, %v852
        %854 = vmatprep.mubr.bf16.mxu0 0
        %855 = vmatmul.mubr.bf16.gmra.mxu0 %v691
        %v856 = vpop.f32.mrf.mxu0
        %v857 = vadd.f32 0.0, %v856
        %v858 = vpop.f32.mrf.mxu0
        %v859 = vadd.f32 0.0, %v858
        %v860 = vpop.f32.mrf.mxu0
        %v861 = vadd.f32 0.0, %v860
        %v862 = vpop.f32.mrf.mxu0
        %v863 = vadd.f32 0.0, %v862
        %864 = vmatprep.mubr.bf16.mxu0 0
        %865 = vmatmul.mubr.bf16.gmra.mxu0 %v692
        %v866 = vpop.f32.mrf.mxu0
        %v867 = vadd.f32 0.0, %v866
        %v868 = vpop.f32.mrf.mxu0
        %v869 = vadd.f32 0.0, %v868
        %v870 = vpop.f32.mrf.mxu0
        %v871 = vadd.f32 0.0, %v870
        %v872 = vpop.f32.mrf.mxu0
        %v873 = vadd.f32 0.0, %v872
        %874 = vmatprep.mubr.bf16.mxu0 0
        %875 = vmatmul.mubr.bf16.gmra.mxu0 %v693
        %v876 = vpop.f32.mrf.mxu0
        %v877 = vadd.f32 0.0, %v876
        %v878 = vpop.f32.mrf.mxu0
        %v879 = vadd.f32 0.0, %v878
        %v880 = vpop.f32.mrf.mxu0
        %v881 = vadd.f32 0.0, %v880
        %v882 = vpop.f32.mrf.mxu0
        %v883 = vadd.f32 0.0, %v882
        %884 = vmatprep.mubr.bf16.mxu0 0
        %885 = vmatmul.mubr.bf16.gmra.mxu0 %v694
        %v886 = vpop.f32.mrf.mxu0
        %v887 = vadd.f32 0.0, %v886
        %v888 = vpop.f32.mrf.mxu0
        %v889 = vadd.f32 0.0, %v888
        %v890 = vpop.f32.mrf.mxu0
        %v891 = vadd.f32 0.0, %v890
        %v892 = vpop.f32.mrf.mxu0
        %v893 = vadd.f32 0.0, %v892
        %894 = vmatprep.mubr.bf16.mxu0 0
        %895 = vmatmul.mubr.bf16.gmra.mxu0 %v695
        %v896 = vpop.f32.mrf.mxu0
        %v897 = vadd.f32 0.0, %v896
        %v898 = vpop.f32.mrf.mxu0
        %v899 = vadd.f32 0.0, %v898
        %v900 = vpop.f32.mrf.mxu0
        %v901 = vadd.f32 0.0, %v900
        %v902 = vpop.f32.mrf.mxu0
        %v903 = vadd.f32 0.0, %v902
        %904 = vdwg.mxu0
        %v905 = vpack.c.bf16 %v831, %v827
        %v906 = vpack.c.bf16 %v833, %v829
        %v907 = vpack.c.bf16 %v841, %v837
        %v908 = vpack.c.bf16 %v843, %v839
        %v909 = vpack.c.bf16 %v851, %v847
        %v910 = vpack.c.bf16 %v853, %v849
        %v911 = vpack.c.bf16 %v861, %v857
        %v912 = vpack.c.bf16 %v863, %v859
        %v913 = vpack.c.bf16 %v871, %v867
        %v914 = vpack.c.bf16 %v873, %v869
        %v915 = vpack.c.bf16 %v881, %v877
        %v916 = vpack.c.bf16 %v883, %v879
        %v917 = vpack.c.bf16 %v891, %v887
        %v918 = vpack.c.bf16 %v893, %v889
        %v919 = vpack.c.bf16 %v901, %v897
        %v920 = vpack.c.bf16 %v903, %v899
        %v929 = vunpack.c.l.b16 %v905
        %v930 = vunpack.c.h.b16 %v905
        %v931 = vunpack.c.l.b16 %v907
        %v932 = vunpack.c.h.b16 %v907
        %v933 = vunpack.c.l.b16 %v909
        %v934 = vunpack.c.h.b16 %v909
        %v935 = vunpack.c.l.b16 %v911
        %v936 = vunpack.c.h.b16 %v911
        %v937 = vunpack.c.l.b16 %v913
        %v938 = vunpack.c.h.b16 %v913
        %v939 = vunpack.c.l.b16 %v915
        %v940 = vunpack.c.h.b16 %v915
        %v941 = vunpack.c.l.b16 %v917
        %v942 = vunpack.c.h.b16 %v917
        %v943 = vunpack.c.l.b16 %v919
        %v944 = vunpack.c.h.b16 %v919
        %v945 = vpack.c.b16 %v929, %v929
        %v946 = vpack.c.b16 %v930, %v930
        %v947 = vpack.c.b16 %v931, %v931
        %v948 = vpack.c.b16 %v932, %v932
        %v949 = vpack.c.b16 %v933, %v933
        %v950 = vpack.c.b16 %v934, %v934
        %v951 = vpack.c.b16 %v935, %v935
        %v952 = vpack.c.b16 %v936, %v936
        %v953 = vpack.c.b16 %v937, %v937
        %v954 = vpack.c.b16 %v938, %v938
        %v955 = vpack.c.b16 %v939, %v939
        %v956 = vpack.c.b16 %v940, %v940
        %v957 = vpack.c.b16 %v941, %v941
        %v958 = vpack.c.b16 %v942, %v942
        %v959 = vpack.c.b16 %v943, %v943
        %v960 = vpack.c.b16 %v944, %v944
        %977 = vst [vmem:[%s387] sm:$0xf] %v945
        %978 = vst [vmem:[%s387 + $0x4] sm:$0xf] %v946
        %979 = vst [vmem:[%s387 + $0x8] sm:$0xf] %v947
        %980 = vst [vmem:[%s387 + $0xc] sm:$0xf] %v948
        %981 = vst [vmem:[%s387 + $0x10] sm:$0xf] %v949
        %982 = vst [vmem:[%s387 + $0x14] sm:$0xf] %v950
        %983 = vst [vmem:[%s387 + $0x18] sm:$0xf] %v951
        %984 = vst [vmem:[%s387 + $0x1c] sm:$0xf] %v952
        %985 = vst [vmem:[%s387 + $0x20] sm:$0xf] %v953
        %986 = vst [vmem:[%s387 + $0x24] sm:$0xf] %v954
        %987 = vst [vmem:[%s387 + $0x28] sm:$0xf] %v955
        %988 = vst [vmem:[%s387 + $0x2c] sm:$0xf] %v956
        %989 = vst [vmem:[%s387 + $0x30] sm:$0xf] %v957
        %990 = vst [vmem:[%s387 + $0x34] sm:$0xf] %v958
        %991 = vst [vmem:[%s387 + $0x38] sm:$0xf] %v959
        %992 = vst [vmem:[%s387 + $0x3c] sm:$0xf] %v960
        %v1001 = vunpack.c.l.b16 %v906
        %v1002 = vunpack.c.h.b16 %v906
        %v1003 = vunpack.c.l.b16 %v908
        %v1004 = vunpack.c.h.b16 %v908
        %v1005 = vunpack.c.l.b16 %v910
        %v1006 = vunpack.c.h.b16 %v910
        %v1007 = vunpack.c.l.b16 %v912
        %v1008 = vunpack.c.h.b16 %v912
        %v1009 = vunpack.c.l.b16 %v914
        %v1010 = vunpack.c.h.b16 %v914
        %v1011 = vunpack.c.l.b16 %v916
        %v1012 = vunpack.c.h.b16 %v916
        %v1013 = vunpack.c.l.b16 %v918
        %v1014 = vunpack.c.h.b16 %v918
        %v1015 = vunpack.c.l.b16 %v920
        %v1016 = vunpack.c.h.b16 %v920
        %v1017 = vpack.c.b16 %v1001, %v1001
        %v1018 = vpack.c.b16 %v1002, %v1002
        %v1019 = vpack.c.b16 %v1003, %v1003
        %v1020 = vpack.c.b16 %v1004, %v1004
        %v1021 = vpack.c.b16 %v1005, %v1005
        %v1022 = vpack.c.b16 %v1006, %v1006
        %v1023 = vpack.c.b16 %v1007, %v1007
        %v1024 = vpack.c.b16 %v1008, %v1008
        %v1025 = vpack.c.b16 %v1009, %v1009
        %v1026 = vpack.c.b16 %v1010, %v1010
        %v1027 = vpack.c.b16 %v1011, %v1011
        %v1028 = vpack.c.b16 %v1012, %v1012
        %v1029 = vpack.c.b16 %v1013, %v1013
        %v1030 = vpack.c.b16 %v1014, %v1014
        %v1031 = vpack.c.b16 %v1015, %v1015
        %v1032 = vpack.c.b16 %v1016, %v1016
        %1049 = vst [vmem:[%s394] sm:$0xf] %v1017
        %1050 = vst [vmem:[%s394 + $0x4] sm:$0xf] %v1018
        %1051 = vst [vmem:[%s394 + $0x8] sm:$0xf] %v1019
        %1052 = vst [vmem:[%s394 + $0xc] sm:$0xf] %v1020
        %1053 = vst [vmem:[%s394 + $0x10] sm:$0xf] %v1021
        %1054 = vst [vmem:[%s394 + $0x14] sm:$0xf] %v1022
        %1055 = vst [vmem:[%s394 + $0x18] sm:$0xf] %v1023
        %1056 = vst [vmem:[%s394 + $0x1c] sm:$0xf] %v1024
        %1057 = vst [vmem:[%s394 + $0x20] sm:$0xf] %v1025
        %1058 = vst [vmem:[%s394 + $0x24] sm:$0xf] %v1026
        %1059 = vst [vmem:[%s394 + $0x28] sm:$0xf] %v1027
        %1060 = vst [vmem:[%s394 + $0x2c] sm:$0xf] %v1028
        %1061 = vst [vmem:[%s394 + $0x30] sm:$0xf] %v1029
        %1062 = vst [vmem:[%s394 + $0x34] sm:$0xf] %v1030
        %1063 = vst [vmem:[%s394 + $0x38] sm:$0xf] %v1031
        %1064 = vst [vmem:[%s394 + $0x3c] sm:$0xf] %v1032
        %s1065 = sand.u32 %s172, 1
        %s1066 = scalar_lea.sflag [#allocation4], %s1065
        %s1067 = sand.u32 %s172, 1
        %s1068 = smul.addr %s1067, 128
        %s1069 = scalar_lea.vmem [#allocation8], %s1068
        %s1070 = sand.u32 %s31, 1
        %s1071 = scalar_lea.sflag [#allocation10], %s1070
        %s1072 = sand.u32 %s200, 1
        %s1073 = smul.addr %s1072, 64
        %s1074 = scalar_lea.vmem [#allocation9], %s1073
        %s1075 = sand.u32 %s31, 1
        %s1076 = scalar_lea.sflag [#allocation10], %s1075
        %s1077 = sand.u32 %s228, 1
        %s1078 = smul.addr %s1077, 64
        %s1079 = scalar_lea.vmem [#allocation11], %s1078
        // Predicated region
        $region53: #{tpu_custom_call.1} parent=39 // pred_check
          %p1080 = pneg %p182
        $region54: #{tpu_custom_call.1} parent=39 // pred_check_branch
          %1082 = sbr.rel (%p1080) target = $region56
        $region55: #{tpu_custom_call.1} parent=39 // pred_region
          %s1083 = smul.u32 16, %s36
          %s1085 = ssub.s32 2048, 2048
          %1086 = vsyncadd %s1066, %s1085
          %s1087 = smul.addr %s35, 32
          %s1088 = sadd.s32 %s1083, %s1087
          %s1089 = smul.addr %s1088, 128
          %s1090 = scalar_lea.hbm %s5, %s1089
          %s1091 = sshll.u32 %s1069, 4
          %s1092 = int_to_ptr.vmem [resolvable:$true] %s1091
          %1097 = dma.vmem_to_hbm [thread:$0]  %s1092, 2048, %s1090, %s1066, 128, 128, 8
        $region56: #{tpu_custom_call.1} parent=39 // pred_fallthru
          _
        // Predicated region
        $region57: #{tpu_custom_call.1} parent=39 // pred_check
          %p1098 = pneg %p210
        $region58: #{tpu_custom_call.1} parent=39 // pred_check_branch
          %1100 = sbr.rel (%p1098) target = $region60
        $region59: #{tpu_custom_call.1} parent=39 // pred_region
          %s1101 = smul.u32 16, %s36
          %s1103 = ssub.s32 1024, 1024
          %1104 = vsyncadd %s1071, %s1103
          %s1105 = smul.addr %s35, 32
          %s1106 = sadd.s32 %s1101, %s1105
          %s1107 = smul.addr %s1106, 64
          %s1108 = scalar_lea.hbm %s6, %s1107
          %s1109 = sshll.u32 %s1074, 4
          %s1110 = int_to_ptr.vmem [resolvable:$true] %s1109
          %1115 = dma.vmem_to_hbm [thread:$0]  %s1110, 1024, %s1108, %s1071, 64, 64, 4
        $region60: #{tpu_custom_call.1} parent=39 // pred_fallthru
          _
        // Predicated region
        $region61: #{tpu_custom_call.1} parent=39 // pred_check
          %p1116 = pneg %p238
        $region62: #{tpu_custom_call.1} parent=39 // pred_check_branch
          %1118 = sbr.rel (%p1116) target = $region64
        $region63: #{tpu_custom_call.1} parent=39 // pred_region
          %s1119 = smul.u32 16, %s36
          %s1121 = ssub.s32 1024, 1024
          %1122 = vsyncadd %s1076, %s1121
          %s1123 = smul.addr %s35, 32
          %s1124 = sadd.s32 %s1119, %s1123
          %s1125 = smul.addr %s1124, 64
          %s1126 = scalar_lea.hbm %s7, %s1125
          %s1127 = sshll.u32 %s1079, 4
          %s1128 = int_to_ptr.vmem [resolvable:$true] %s1127
          %1133 = dma.vmem_to_hbm [thread:$0]  %s1128, 1024, %s1126, %s1076, 64, 64, 4
        $region64: #{tpu_custom_call.1} parent=39 // pred_fallthru
          _
      $region40: #{tpu_custom_call.1} parent=5 // pred_fallthru
        _
      %p1134 = scmp.le.s32.totalorder 2, %s26
      // Predicated region
      $region65: #{tpu_custom_call.1} parent=5 // pred_check
        %p1135 = pneg %p1134
      $region66: #{tpu_custom_call.1} parent=5 // pred_check_branch
        %1137 = sbr.rel (%p1135) target = $region68
      $region67: #{tpu_custom_call.1} parent=5 // pred_region
        %s1138 = ssub.s32 %s26, 2
        // Predicated region
        $region69: #{tpu_custom_call.1} parent=67 // pred_check
          %p1139 = pneg %p188
        $region70: #{tpu_custom_call.1} parent=67 // pred_check_branch
          %1141 = sbr.rel (%p1139) target = $region72
        $region71: #{tpu_custom_call.1} parent=67 // pred_region
          %s1142 = sand.u32 %s173, 1
          %s1143 = scalar_lea.sflag [#allocation4], %s1142
          %s1144 = sand.u32 %s173, 1
          %s1145 = smul.addr %s1144, 128
          %s1146 = scalar_lea.vmem [#allocation8], %s1145
          %1147 = dma.done %s1143, 2048
        $region72: #{tpu_custom_call.1} parent=67 // pred_fallthru
          _
        // Predicated region
        $region73: #{tpu_custom_call.1} parent=67 // pred_check
          %p1148 = pneg %p216
        $region74: #{tpu_custom_call.1} parent=67 // pred_check_branch
          %1150 = sbr.rel (%p1148) target = $region76
        $region75: #{tpu_custom_call.1} parent=67 // pred_region
          %s1151 = sand.u32 %s32, 1
          %s1152 = scalar_lea.sflag [#allocation10], %s1151
          %s1153 = sand.u32 %s201, 1
          %s1154 = smul.addr %s1153, 64
          %s1155 = scalar_lea.vmem [#allocation9], %s1154
          %1156 = dma.done %s1152, 1024
        $region76: #{tpu_custom_call.1} parent=67 // pred_fallthru
          _
        // Predicated region
        $region77: #{tpu_custom_call.1} parent=67 // pred_check
          %p1157 = pneg %p244
        $region78: #{tpu_custom_call.1} parent=67 // pred_check_branch
          %1159 = sbr.rel (%p1157) target = $region80
        $region79: #{tpu_custom_call.1} parent=67 // pred_region
          %s1160 = sand.u32 %s32, 1
          %s1161 = scalar_lea.sflag [#allocation10], %s1160
          %s1162 = sand.u32 %s229, 1
          %s1163 = smul.addr %s1162, 64
          %s1164 = scalar_lea.vmem [#allocation11], %s1163
          %1165 = dma.done %s1161, 1024
        $region80: #{tpu_custom_call.1} parent=67 // pred_fallthru
          _
      $region68: #{tpu_custom_call.1} parent=5 // pred_fallthru
        _
    $region6: #{tpu_custom_call.1} parent=1 // loop_footer
      %s30 = sadd.s32 1, %s26
    $region7: #{tpu_custom_call.1} parent=1 // loop_footer_branch
      %25 = sbr.rel target = $region3
    $region8: #{tpu_custom_call.1} parent=1 // loop_exit
      _
    %1166 = vsyncpa [#allocation3], 1
    %s1167 = scalar_lea.sflag [#allocation3], 1
    %1168 = vsyncpa %s1167, 1
    %1169 = vsyncpa [#allocation6], 1
    %s1170 = scalar_lea.sflag [#allocation6], 1
    %1171 = vsyncpa %s1170, 1
    %1172 = vsyncpa [#allocation4], 1
    %s1173 = scalar_lea.sflag [#allocation4], 1
    %1174 = vsyncpa %s1173, 1
    %1175 = vsyncpa [#allocation10], 1
    %s1176 = scalar_lea.sflag [#allocation10], 1
    %1177 = vsyncpa %s1176, 1

</llo_original>
